<compile_context>
chip_gen: v6e
topology: v6e:2x2x1
jax: 0.10.0
libtpu: 0.0.40
codegen_flags: <defaults>
</compile_context>

<pallas_src>
import math

import jax
import jax.numpy as jnp
from jax.experimental import pallas as pl
from jax.experimental.pallas import tpu as pltpu


def _round_up(x: int, m: int) -> int:
    return ((x + m - 1) // m) * m


def _time_embedding_kernel(t_ref, fp_ref, w1_ref, b1_ref, w2_ref, b2_ref, out_ref):
    """One batch tile: sinusoidal embedding -> lin1 -> Swish -> lin2."""
    t = t_ref[...]                                  # (TB, 1) f32
    freqs = fp_ref[0:1, :]                          # (1, Q)  f32
    phase = fp_ref[1:2, :]                          # (1, Q)  f32: 0 | pi/2

    # Single EUP sin per embedding element: columns [half, Q) carry a +pi/2
    # phase offset, i.e. sin(x + pi/2) == cos(x).
    emb = jnp.sin(t * freqs + phase)                # (TB, Q) f32

    # lin1: cast activations to the weight dtype (bf16 MXU path when weights
    # are bf16); accumulate in f32.
    h = jnp.dot(emb.astype(w1_ref.dtype), w1_ref[...],
                preferred_element_type=jnp.float32) + b1_ref[...]

    # Swish: x*sigmoid(x) == 0.5*x*(1 + tanh(0.5*x))  (exact identity).
    # One EUP transcendental per element; the extra mul/adds go to idle VALU slots.
    h = 0.5 * h * (1.0 + jnp.tanh(0.5 * h))

    # lin2
    out = jnp.dot(h.astype(w2_ref.dtype), w2_ref[...],
                  preferred_element_type=jnp.float32) + b2_ref[...]
    out_ref[...] = out.astype(out_ref.dtype)


def time_embedding(t, w1, b1, w2, b2, *, tile_b: int = 1024, out_dtype=jnp.float32):
    """t: (B,) or (B,1); w1: (C//4, C); b1: (1, C); w2: (C, C); b2: (1, C) -> (B, C).

    Weights may be f32 or bf16 (bf16 recommended in production).  Set
    out_dtype=jnp.bfloat16 to halve the output HBM writeback if the consumer
    accepts it.
    """
    if t.ndim == 1:
        t = t[:, None]
    t = t.astype(jnp.float32)

    B = t.shape[0]
    quarter, C = w1.shape
    assert w2.shape == (C, C) and b1.shape == (1, C) and b2.shape == (1, C)
    # PyTorch divides by (half_dim - 1): requires C >= 16.
    assert C % 8 == 0 and C >= 16, "n_channels must be >= 16 and divisible by 8"
    assert quarter == C // 4
    half_dim = C // 8

    # Loop-invariant constants packed into one (2, Q) array:
    #   row 0 = frequencies (repeated for the sin / cos halves)
    #   row 1 = phase offset (0 for sin half, pi/2 for cos half)
    emb_scale = math.log(10000.0) / (half_dim - 1)
    freqs_half = jnp.exp(-emb_scale * jnp.arange(half_dim, dtype=jnp.float32))
    freqs = jnp.concatenate([freqs_half, freqs_half])
    phase = jnp.concatenate([jnp.zeros((half_dim,), jnp.float32),
                             jnp.full((half_dim,), math.pi / 2.0, jnp.float32)])
    freq_phase = jnp.stack([freqs, phase])          # (2, Q)

    # Batch tiling: multiple of 8 sublanes, capped at the (padded) batch.
    padded_b = _round_up(B, 8)
    tile_b = _round_up(max(8, min(int(tile_b), padded_b)), 8)
    # v7x: with a single grid step, ("parallel",) cannot shard across the two
    # TensorCores; force >= 2 steps once the batch is large enough to matter.
    if padded_b >= 512 and pl.cdiv(padded_b, tile_b) < 2:
        tile_b = min(tile_b, _round_up(pl.cdiv(padded_b, 2), 256))
    num_tiles = pl.cdiv(B, tile_b)

    # VMEM budget: single-buffered resident weights/constants + double-buffered
    # t/out streams + intermediates + slack; cap is generation-aware.
    out_isz = jnp.dtype(out_dtype).itemsize
    resident = (quarter * C * jnp.dtype(w1.dtype).itemsize
                + C * C * jnp.dtype(w2.dtype).itemsize
                + 2 * C * 4 + 2 * quarter * 4)
    streamed = tile_b * (4 + C * out_isz)                 # t in + out, per buffer
    working = tile_b * (quarter + 2 * C) * 4              # emb / h / out intermediates
    vmem_est = resident + 2 * streamed + working + (4 << 20)
    try:
        vmem_cap = int(pltpu.get_tpu_info().vmem_capacity_bytes)
    except Exception:
        vmem_cap = 64 << 20                               # conservative (v7x per-TC)
    vmem_limit = int(min(max(vmem_est, 16 << 20), int(vmem_cap * 0.85)))

    def _call(single_buffer_consts: bool):
        if single_buffer_consts:
            # Constant index_maps are never re-DMA'd; one VMEM buffer is enough.
            const_kw = dict(pipeline_mode=pl.Buffered(1))
        else:
            const_kw = {}

        def const_spec(shape):
            return pl.BlockSpec(shape, lambda i: (0, 0), **const_kw)

        return pl.pallas_call(
            _time_embedding_kernel,
            out_shape=jax.ShapeDtypeStruct((B, C), out_dtype),
            grid=(num_tiles,),
            in_specs=[
                pl.BlockSpec((tile_b, 1), lambda i: (i, 0)),   # t (streamed)
                const_spec((2, quarter)),                      # freqs / phase offsets
                const_spec((quarter, C)),                      # w1 (resident)
                const_spec((1, C)),                            # b1
                const_spec((C, C)),                            # w2 (resident)
                const_spec((1, C)),                            # b2
            ],
            out_specs=pl.BlockSpec((tile_b, C), lambda i: (i, 0)),
            compiler_params=pltpu.CompilerParams(
                dimension_semantics=("parallel",),   # shards batch steps across TCs
                vmem_limit_bytes=vmem_limit,
            ),
        )(t, freq_phase, w1, b1, w2, b2)

    try:
        return _call(True)
    except Exception:
        # TODO(synk): drop this fallback once pl.Buffered(1) on constant-index
        # inputs is confirmed supported on the deployed jaxlib.
        return _call(False)


def _reference(t, w1, b1, w2, b2):
    """Pure-JAX reference mirroring the PyTorch forward exactly (f32 math)."""
    if t.ndim == 1:
        t = t[:, None]
    t = t.astype(jnp.float32)
    C = w1.shape[1]
    half_dim = C // 8
    emb_scale = math.log(10000.0) / (half_dim - 1)
    freqs = jnp.exp(jnp.arange(half_dim, dtype=jnp.float32) * (-emb_scale))
    emb = t * freqs[None, :]
    emb = jnp.concatenate([jnp.sin(emb), jnp.cos(emb)], axis=1)
    h = emb @ w1.astype(jnp.float32) + b1
    h = h * jax.nn.sigmoid(h)
    return h @ w2.astype(jnp.float32) + b2


if __name__ == "__main__":
    n_channels = 32
    batch = 8

    key = jax.random.PRNGKey(0)
    k_t, k_w1, k_b1, k_w2, k_b2, k_t2 = jax.random.split(key, 6)

    # Diffusion timestep values, (B, 1) f32.
    t = jax.random.uniform(k_t, (batch, 1), jnp.float32, minval=0.0, maxval=1000.0)

    # "PyTorch-Linear-like" init (uniform +-1/sqrt(fan_in)), stored transposed.
    fan1 = n_channels // 4
    lim1 = 1.0 / math.sqrt(fan1)
    w1 = jax.random.uniform(k_w1, (fan1, n_channels), jnp.float32, -lim1, lim1)
    b1 = jax.random.uniform(k_b1, (1, n_channels), jnp.float32, -lim1, lim1)

    fan2 = n_channels
    lim2 = 1.0 / math.sqrt(fan2)
    w2 = jax.random.uniform(k_w2, (n_channels, n_channels), jnp.float32, -lim2, lim2)
    b2 = jax.random.uniform(k_b2, (1, n_channels), jnp.float32, -lim2, lim2)

    # --- f32 weights (tolerance covers sin(x+pi/2)-vs-cos(x) f32 arg reduction) ---
    out = jax.block_until_ready(time_embedding(t, w1, b1, w2, b2))
    ref = _reference(t, w1, b1, w2, b2)
    assert out.shape == (batch, n_channels)
    assert jnp.allclose(out, ref, atol=5e-3, rtol=5e-3), "f32 mismatch vs reference"

    # --- multi-step grid with a partial last tile (exercises pipelining/masking) ---
    batch2 = 40
    t2 = jax.random.uniform(k_t2, (batch2, 1), jnp.float32, minval=0.0, maxval=1000.0)
    out2 = jax.block_until_ready(time_embedding(t2, w1, b1, w2, b2, tile_b=16))
    ref2 = _reference(t2, w1, b1, w2, b2)
    assert out2.shape == (batch2, n_channels)
    assert jnp.allclose(out2, ref2, atol=5e-3, rtol=5e-3), "gridded mismatch vs reference"

    # --- production-style path: bf16 weights + bf16 output, f32 accumulation ---
    w1_bf = w1.astype(jnp.bfloat16)
    w2_bf = w2.astype(jnp.bfloat16)
    out_bf = jax.block_until_ready(
        time_embedding(t, w1_bf, b1, w2_bf, b2, out_dtype=jnp.bfloat16))
    ref_bf = _reference(t, w1_bf.astype(jnp.float32), b1, w2_bf.astype(jnp.float32), b2)
    assert out_bf.dtype == jnp.bfloat16
    assert jnp.allclose(out_bf.astype(jnp.float32), ref_bf, atol=5e-2, rtol=5e-2), \
        "bf16 mismatch vs reference"

    print("KERNEL_OK")
</pallas_src>

<mosaic_0001>
module attributes {stable_mosaic.version = 11 : i64} {
  func.func @_time_embedding_kernel(%arg0: i32, %arg1: memref<8x1xf32, #tpu.memory_space<vmem>>, %arg2: memref<2x8xf32, #tpu.memory_space<vmem>>, %arg3: memref<8x32xf32, #tpu.memory_space<vmem>>, %arg4: memref<1x32xf32, #tpu.memory_space<vmem>>, %arg5: memref<32x32xf32, #tpu.memory_space<vmem>>, %arg6: memref<1x32xf32, #tpu.memory_space<vmem>>, %arg7: memref<8x32xf32, #tpu.memory_space<vmem>>) attributes {dimension_semantics = [#tpu.dimension_semantics<parallel>], iteration_bounds = array<i64: 1>, scalar_prefetch = 0 : i64, scratch_operands = 0 : i64, tpu.core_type = #tpu.core_type<tc>, window_params = [{transform_indices = @transform_0, window_bounds = array<i64: 8, 1>}, {pipeline_mode = #tpu.pipeline_mode<synchronous>, transform_indices = @transform_1, window_bounds = array<i64: 2, 8>}, {pipeline_mode = #tpu.pipeline_mode<synchronous>, transform_indices = @transform_2, window_bounds = array<i64: 8, 32>}, {pipeline_mode = #tpu.pipeline_mode<synchronous>, transform_indices = @transform_3, window_bounds = array<i64: 1, 32>}, {pipeline_mode = #tpu.pipeline_mode<synchronous>, transform_indices = @transform_4, window_bounds = array<i64: 32, 32>}, {pipeline_mode = #tpu.pipeline_mode<synchronous>, transform_indices = @transform_5, window_bounds = array<i64: 1, 32>}, {transform_indices = @transform_6, window_bounds = array<i64: 8, 32>}]} {
    %c0 = arith.constant 0 : index
    %c0_0 = arith.constant 0 : index
    %0 = vector.load %arg1[%c0, %c0_0] : memref<8x1xf32, #tpu.memory_space<vmem>>, vector<8x1xf32>
    %c0_1 = arith.constant 0 : index
    %c0_2 = arith.constant 0 : index
    %1 = vector.load %arg2[%c0_1, %c0_2] : memref<2x8xf32, #tpu.memory_space<vmem>>, vector<1x8xf32>
    %c1 = arith.constant 1 : index
    %c0_3 = arith.constant 0 : index
    %2 = vector.load %arg2[%c1, %c0_3] : memref<2x8xf32, #tpu.memory_space<vmem>>, vector<1x8xf32>
    %3 = vector.broadcast %0 : vector<8x1xf32> to vector<8x8xf32>
    %4 = vector.broadcast %1 : vector<1x8xf32> to vector<8x8xf32>
    %5 = arith.mulf %3, %4 : vector<8x8xf32>
    %6 = vector.broadcast %2 : vector<1x8xf32> to vector<8x8xf32>
    %7 = arith.addf %5, %6 : vector<8x8xf32>
    %8 = math.sin %7 : vector<8x8xf32>
    %c0_4 = arith.constant 0 : index
    %c0_5 = arith.constant 0 : index
    %9 = vector.load %arg3[%c0_4, %c0_5] : memref<8x32xf32, #tpu.memory_space<vmem>>, vector<8x32xf32>
    %cst = arith.constant dense<0.000000e+00> : vector<8x32xf32>
    %10 = tpu.matmul %8, %9, %cst {dimension_numbers = #tpu.dot_dimension_numbers<[1], [0], [0], [1], [0, 0, 1, 1], [], []>} : vector<8x8xf32>, vector<8x32xf32>, vector<8x32xf32> -> vector<8x32xf32>
    %c0_6 = arith.constant 0 : index
    %c0_7 = arith.constant 0 : index
    %11 = vector.load %arg4[%c0_6, %c0_7] : memref<1x32xf32, #tpu.memory_space<vmem>>, vector<1x32xf32>
    %12 = vector.broadcast %11 : vector<1x32xf32> to vector<8x32xf32>
    %13 = arith.addf %10, %12 : vector<8x32xf32>
    %cst_8 = arith.constant 5.000000e-01 : f32
    %14 = vector.broadcast %cst_8 : f32 to vector<8x32xf32>
    %15 = arith.mulf %14, %13 : vector<8x32xf32>
    %cst_9 = arith.constant 5.000000e-01 : f32
    %16 = vector.broadcast %cst_9 : f32 to vector<8x32xf32>
    %17 = arith.mulf %16, %13 : vector<8x32xf32>
    %18 = math.tanh %17 : vector<8x32xf32>
    %cst_10 = arith.constant 1.000000e+00 : f32
    %19 = vector.broadcast %cst_10 : f32 to vector<8x32xf32>
    %20 = arith.addf %19, %18 : vector<8x32xf32>
    %21 = arith.mulf %15, %20 : vector<8x32xf32>
    %c0_11 = arith.constant 0 : index
    %c0_12 = arith.constant 0 : index
    %22 = vector.load %arg5[%c0_11, %c0_12] : memref<32x32xf32, #tpu.memory_space<vmem>>, vector<32x32xf32>
    %cst_13 = arith.constant dense<0.000000e+00> : vector<8x32xf32>
    %23 = tpu.matmul %21, %22, %cst_13 {dimension_numbers = #tpu.dot_dimension_numbers<[1], [0], [0], [1], [0, 0, 1, 1], [], []>} : vector<8x32xf32>, vector<32x32xf32>, vector<8x32xf32> -> vector<8x32xf32>
    %c0_14 = arith.constant 0 : index
    %c0_15 = arith.constant 0 : index
    %24 = vector.load %arg6[%c0_14, %c0_15] : memref<1x32xf32, #tpu.memory_space<vmem>>, vector<1x32xf32>
    %25 = vector.broadcast %24 : vector<1x32xf32> to vector<8x32xf32>
    %26 = arith.addf %23, %25 : vector<8x32xf32>
    %c0_16 = arith.constant 0 : index
    %c0_17 = arith.constant 0 : index
    %27 = vector.load %arg7[%c0_16, %c0_17] : memref<8x32xf32, #tpu.memory_space<vmem>>, vector<8x32xf32>
    tpu.vector_store %arg7[%c0_16, %c0_17], %26 {strides = array<i32>} : memref<8x32xf32, #tpu.memory_space<vmem>>, vector<8x32xf32>,
    return
  }
  func.func @transform_0(%arg0: i32) -> (i32, i32) {
    %c0_i32 = arith.constant 0 : i32
    %c0_i32_0 = arith.constant 0 : i32
    return %arg0, %c0_i32 : i32, i32
  }
  func.func @transform_1(%arg0: i32) -> (i32, i32) {
    %c0_i32 = arith.constant 0 : i32
    %c0_i32_0 = arith.constant 0 : i32
    %c0_i32_1 = arith.constant 0 : i32
    return %c0_i32, %c0_i32_0 : i32, i32
  }
  func.func @transform_2(%arg0: i32) -> (i32, i32) {
    %c0_i32 = arith.constant 0 : i32
    %c0_i32_0 = arith.constant 0 : i32
    %c0_i32_1 = arith.constant 0 : i32
    return %c0_i32, %c0_i32_0 : i32, i32
  }
  func.func @transform_3(%arg0: i32) -> (i32, i32) {
    %c0_i32 = arith.constant 0 : i32
    %c0_i32_0 = arith.constant 0 : i32
    %c0_i32_1 = arith.constant 0 : i32
    return %c0_i32, %c0_i32_0 : i32, i32
  }
  func.func @transform_4(%arg0: i32) -> (i32, i32) {
    %c0_i32 = arith.constant 0 : i32
    %c0_i32_0 = arith.constant 0 : i32
    %c0_i32_1 = arith.constant 0 : i32
    return %c0_i32, %c0_i32_0 : i32, i32
  }
  func.func @transform_5(%arg0: i32) -> (i32, i32) {
    %c0_i32 = arith.constant 0 : i32
    %c0_i32_0 = arith.constant 0 : i32
    %c0_i32_1 = arith.constant 0 : i32
    return %c0_i32, %c0_i32_0 : i32, i32
  }
  func.func @transform_6(%arg0: i32) -> (i32, i32) {
    %c0_i32 = arith.constant 0 : i32
    %c0_i32_0 = arith.constant 0 : i32
    return %arg0, %c0_i32 : i32, i32
  }
}

module attributes {stable_mosaic.version = 11 : i64} {
  func.func @_time_embedding_kernel(%arg0: i32, %arg1: memref<8x1xf32, #tpu.memory_space<vmem>>, %arg2: memref<2x8xf32, #tpu.memory_space<vmem>>, %arg3: memref<8x32xf32, #tpu.memory_space<vmem>>, %arg4: memref<1x32xf32, #tpu.memory_space<vmem>>, %arg5: memref<32x32xf32, #tpu.memory_space<vmem>>, %arg6: memref<1x32xf32, #tpu.memory_space<vmem>>, %arg7: memref<8x32xf32, #tpu.memory_space<vmem>>) attributes {dimension_semantics = [#tpu.dimension_semantics<parallel>], iteration_bounds = array<i64: 1>, scalar_prefetch = 0 : i64, scratch_operands = 0 : i64, tpu.core_type = #tpu.core_type<tc>, window_params = [{transform_indices = @transform_0, window_bounds = array<i64: 8, 1>}, {pipeline_mode = #tpu.pipeline_mode<synchronous>, transform_indices = @transform_1, window_bounds = array<i64: 2, 8>}, {pipeline_mode = #tpu.pipeline_mode<synchronous>, transform_indices = @transform_2, window_bounds = array<i64: 8, 32>}, {pipeline_mode = #tpu.pipeline_mode<synchronous>, transform_indices = @transform_3, window_bounds = array<i64: 1, 32>}, {pipeline_mode = #tpu.pipeline_mode<synchronous>, transform_indices = @transform_4, window_bounds = array<i64: 32, 32>}, {pipeline_mode = #tpu.pipeline_mode<synchronous>, transform_indices = @transform_5, window_bounds = array<i64: 1, 32>}, {transform_indices = @transform_6, window_bounds = array<i64: 8, 32>}]} {
    %c0 = arith.constant 0 : index
    %c0_0 = arith.constant 0 : index
    %0 = vector.load %arg1[%c0, %c0_0] : memref<8x1xf32, #tpu.memory_space<vmem>>, vector<8x1xf32>
    %c0_1 = arith.constant 0 : index
    %c0_2 = arith.constant 0 : index
    %1 = vector.load %arg2[%c0_1, %c0_2] : memref<2x8xf32, #tpu.memory_space<vmem>>, vector<1x8xf32>
    %c1 = arith.constant 1 : index
    %c0_3 = arith.constant 0 : index
    %2 = vector.load %arg2[%c1, %c0_3] : memref<2x8xf32, #tpu.memory_space<vmem>>, vector<1x8xf32>
    %3 = vector.broadcast %0 : vector<8x1xf32> to vector<8x8xf32>
    %4 = vector.broadcast %1 : vector<1x8xf32> to vector<8x8xf32>
    %5 = arith.mulf %3, %4 : vector<8x8xf32>
    %6 = vector.broadcast %2 : vector<1x8xf32> to vector<8x8xf32>
    %7 = arith.addf %5, %6 : vector<8x8xf32>
    %8 = math.sin %7 : vector<8x8xf32>
    %c0_4 = arith.constant 0 : index
    %c0_5 = arith.constant 0 : index
    %9 = vector.load %arg3[%c0_4, %c0_5] : memref<8x32xf32, #tpu.memory_space<vmem>>, vector<8x32xf32>
    %cst = arith.constant dense<0.000000e+00> : vector<8x32xf32>
    %10 = tpu.matmul %8, %9, %cst {dimension_numbers = #tpu.dot_dimension_numbers<[1], [0], [0], [1], [0, 0, 1, 1], [], []>} : vector<8x8xf32>, vector<8x32xf32>, vector<8x32xf32> -> vector<8x32xf32>
    %c0_6 = arith.constant 0 : index
    %c0_7 = arith.constant 0 : index
    %11 = vector.load %arg4[%c0_6, %c0_7] : memref<1x32xf32, #tpu.memory_space<vmem>>, vector<1x32xf32>
    %12 = vector.broadcast %11 : vector<1x32xf32> to vector<8x32xf32>
    %13 = arith.addf %10, %12 : vector<8x32xf32>
    %cst_8 = arith.constant 5.000000e-01 : f32
    %14 = vector.broadcast %cst_8 : f32 to vector<8x32xf32>
    %15 = arith.mulf %14, %13 : vector<8x32xf32>
    %cst_9 = arith.constant 5.000000e-01 : f32
    %16 = vector.broadcast %cst_9 : f32 to vector<8x32xf32>
    %17 = arith.mulf %16, %13 : vector<8x32xf32>
    %18 = math.tanh %17 : vector<8x32xf32>
    %cst_10 = arith.constant 1.000000e+00 : f32
    %19 = vector.broadcast %cst_10 : f32 to vector<8x32xf32>
    %20 = arith.addf %19, %18 : vector<8x32xf32>
    %21 = arith.mulf %15, %20 : vector<8x32xf32>
    %c0_11 = arith.constant 0 : index
    %c0_12 = arith.constant 0 : index
    %22 = vector.load %arg5[%c0_11, %c0_12] : memref<32x32xf32, #tpu.memory_space<vmem>>, vector<32x32xf32>
    %cst_13 = arith.constant dense<0.000000e+00> : vector<8x32xf32>
    %23 = tpu.matmul %21, %22, %cst_13 {dimension_numbers = #tpu.dot_dimension_numbers<[1], [0], [0], [1], [0, 0, 1, 1], [], []>} : vector<8x32xf32>, vector<32x32xf32>, vector<8x32xf32> -> vector<8x32xf32>
    %c0_14 = arith.constant 0 : index
    %c0_15 = arith.constant 0 : index
    %24 = vector.load %arg6[%c0_14, %c0_15] : memref<1x32xf32, #tpu.memory_space<vmem>>, vector<1x32xf32>
    %25 = vector.broadcast %24 : vector<1x32xf32> to vector<8x32xf32>
    %26 = arith.addf %23, %25 : vector<8x32xf32>
    %c0_16 = arith.constant 0 : index
    %c0_17 = arith.constant 0 : index
    %27 = vector.load %arg7[%c0_16, %c0_17] : memref<8x32xf32, #tpu.memory_space<vmem>>, vector<8x32xf32>
    tpu.vector_store %arg7[%c0_16, %c0_17], %26 {strides = array<i32>} : memref<8x32xf32, #tpu.memory_space<vmem>>, vector<8x32xf32>,
    return
  }
  func.func @transform_0(%arg0: i32) -> (i32, i32) {
    %c0_i32 = arith.constant 0 : i32
    %c0_i32_0 = arith.constant 0 : i32
    return %arg0, %c0_i32 : i32, i32
  }
  func.func @transform_1(%arg0: i32) -> (i32, i32) {
    %c0_i32 = arith.constant 0 : i32
    %c0_i32_0 = arith.constant 0 : i32
    %c0_i32_1 = arith.constant 0 : i32
    return %c0_i32, %c0_i32_0 : i32, i32
  }
  func.func @transform_2(%arg0: i32) -> (i32, i32) {
    %c0_i32 = arith.constant 0 : i32
    %c0_i32_0 = arith.constant 0 : i32
    %c0_i32_1 = arith.constant 0 : i32
    return %c0_i32, %c0_i32_0 : i32, i32
  }
  func.func @transform_3(%arg0: i32) -> (i32, i32) {
    %c0_i32 = arith.constant 0 : i32
    %c0_i32_0 = arith.constant 0 : i32
    %c0_i32_1 = arith.constant 0 : i32
    return %c0_i32, %c0_i32_0 : i32, i32
  }
  func.func @transform_4(%arg0: i32) -> (i32, i32) {
    %c0_i32 = arith.constant 0 : i32
    %c0_i32_0 = arith.constant 0 : i32
    %c0_i32_1 = arith.constant 0 : i32
    return %c0_i32, %c0_i32_0 : i32, i32
  }
  func.func @transform_5(%arg0: i32) -> (i32, i32) {
    %c0_i32 = arith.constant 0 : i32
    %c0_i32_0 = arith.constant 0 : i32
    %c0_i32_1 = arith.constant 0 : i32
    return %c0_i32, %c0_i32_0 : i32, i32
  }
  func.func @transform_6(%arg0: i32) -> (i32, i32) {
    %c0_i32 = arith.constant 0 : i32
    %c0_i32_0 = arith.constant 0 : i32
    return %arg0, %c0_i32 : i32, i32
  }
}

</mosaic_0001>

<llo_original>
// kernel: tpu_custom_call.1
$region0: #{tpu_custom_call.1}
  #allocation0 [shape = 'u32[]', space=smem, size = 0x4, offset = 0x4, fixed_abs, tag = 'smem constant byte address 0x4 - core index']
  #allocation1 [shape = 'u32[144,128]{1,0:T(1,128)}', space=vmem, size = 0x12000, scoped, tag = 'internal scratch']
  %s0 = inlined_call_operand.vmem [shape: f32[8,1], index: 0, kind: input, shape index: {}]
  %s1 = inlined_call_operand.vmem [shape: f32[2,8], index: 1, kind: input, shape index: {}]
  %s2 = inlined_call_operand.vmem [shape: f32[8,32], index: 2, kind: input, shape index: {}]
  %s3 = inlined_call_operand.vmem [shape: f32[1,32], index: 3, kind: input, shape index: {}]
  %s4 = inlined_call_operand.hbm [shape: f32[32,32], index: 4, kind: input, shape index: {}]
  %s5 = inlined_call_operand.vmem [shape: f32[1,32], index: 5, kind: input, shape index: {}]
  %s6 = inlined_call_operand.hbm [shape: f32[8,32], index: 6, kind: output, shape index: {}]
  %s7 = sld [smem:[#allocation0]]
  $region38: #{tpu_custom_call.1} parent=0
    _
  %s9 = ssub.s32 1, %s7
  %s10 = scalar_select 0, %s9, %s7
  $region1: #{tpu_custom_call.1} parent=0
    #allocation2 [shape = 'u8[16384]{0}', space=vmem, size = 0x4000, scoped, tag = 'input window, operand 4, single buffered']
    #allocation3 [shape = 's32[1]{0}', space=sflag, size = 0x4, scoped, tag = 'scoped memory for tpu_custom_call.1']
    #allocation4 [shape = 's32[1]{0}', space=sflag, size = 0x4, scoped, tag = 'scoped memory for tpu_custom_call.1']
    #allocation5 [shape = 'u8[4096]{0}', space=vmem, size = 0x1000, scoped, tag = 'output window, operand 0, single buffered']
    %11 = vsyncpa [#allocation3], 0
    %12 = vsyncpa [#allocation4], 0
    // Predicated region
    $region2: #{tpu_custom_call.1} parent=1 // pred_check
      _
    $region3: #{tpu_custom_call.1} parent=1 // pred_check_branch
      %14 = sbr.rel (0) target = $region5
    $region4: #{tpu_custom_call.1} parent=1 // pred_region
      _
    $region5: #{tpu_custom_call.1} parent=1 // pred_fallthru
      _
    // Predicated region
    $region6: #{tpu_custom_call.1} parent=1 // pred_check
      _
    $region7: #{tpu_custom_call.1} parent=1 // pred_check_branch
      %16 = sbr.rel (0) target = $region9
    $region8: #{tpu_custom_call.1} parent=1 // pred_region
      _
    $region9: #{tpu_custom_call.1} parent=1 // pred_fallthru
      _
    // Predicated region
    $region10: #{tpu_custom_call.1} parent=1 // pred_check
      _
    $region11: #{tpu_custom_call.1} parent=1 // pred_check_branch
      %18 = sbr.rel (0) target = $region13
    $region12: #{tpu_custom_call.1} parent=1 // pred_region
      _
    $region13: #{tpu_custom_call.1} parent=1 // pred_fallthru
      _
    // Predicated region
    $region14: #{tpu_custom_call.1} parent=1 // pred_check
      _
    $region15: #{tpu_custom_call.1} parent=1 // pred_check_branch
      %20 = sbr.rel (0) target = $region17
    $region16: #{tpu_custom_call.1} parent=1 // pred_region
      _
    $region17: #{tpu_custom_call.1} parent=1 // pred_fallthru
      _
    // Predicated region
    $region18: #{tpu_custom_call.1} parent=1 // pred_check
      _
    $region19: #{tpu_custom_call.1} parent=1 // pred_check_branch
      %22 = sbr.rel (0) target = $region21
    $region20: #{tpu_custom_call.1} parent=1 // pred_region
      %s24 = ssub.s32 512, 512
      %25 = vsyncadd [#allocation3], %s24
      %s26 = sshll.u32 [#allocation2], 4
      %s27 = int_to_ptr.vmem [resolvable:$true] %s26
      %32 = dma.hbm_to_vmem [thread:$0]  %s4, 512, %s27, [#allocation3], 128, 128, 8
    $region21: #{tpu_custom_call.1} parent=1 // pred_fallthru
      _
    // Predicated region
    $region22: #{tpu_custom_call.1} parent=1 // pred_check
      _
    $region23: #{tpu_custom_call.1} parent=1 // pred_check_branch
      %34 = sbr.rel (0) target = $region25
    $region24: #{tpu_custom_call.1} parent=1 // pred_region
      _
    $region25: #{tpu_custom_call.1} parent=1 // pred_fallthru
      _
    // Predicated region
    $region26: #{tpu_custom_call.1} parent=1 // pred_check
      _
    $region27: #{tpu_custom_call.1} parent=1 // pred_check_branch
      %36 = sbr.rel (0) target = $region29
    $region28: #{tpu_custom_call.1} parent=1 // pred_region
      %37 = dma.done [#allocation3], 512
    $region29: #{tpu_custom_call.1} parent=1 // pred_fallthru
      _
    %v38 = vld [vmem:[%s0] sm:$0xff]
    %v39 = vld [vmem:[%s1] sm:$0x1]
    %v40 = vld [vmem:[%s1 + $0x1] sm:$0x1]
    %42 = vset.pattern.permute.xlu0 0
    %43 = vperm.xlu0 %42, %v38
    %v44 = vpop.permute.xlu0 %43
    %v46 = vlaneseq
    %v47 = vshrl.u32 %v46, 7
    %v48 = vsub.s32 0, %v47
    %v49 = vrot.slane %v39, %v48
    %v50 = vmul.f32 %v44, %v49
    %v51 = vlaneseq
    %v52 = vshrl.u32 %v51, 7
    %v53 = vsub.s32 0, %v52
    %v54 = vrot.slane %v40, %v53
    %v55 = vadd.f32 %v50, %v54
    %v56 = vand.u32 2147483647, %v55
    %vm57 = vcmp.le.f32.partialorder %v56, 0.7853982
    %vm58 = vcmp.lt.s32.totalorder %v55, 0
    %v59 = vand.u32 %v55, 2139095040
    %v60 = vshrl.u32 %v59, 23
    %v61 = vsub.s32 %v60, 127
    %v62 = vand.u32 2147483647, %v55
    %v63 = vand.u32 %v62, 8388607
    %v64 = vor.u32 %v63, 8388608
    %v65 = vsub.s32 0, %v64
    %v66 = vadd.s32 %v61, 1
    %vm67 = vcmp.gt.s32.totalorder %v66, 0
    %v68 = vsel %vm67, %v66, 0
    %v69 = vshrl.u32 %v68, 5
    %v70 = vand.u32 %v68, 31
    %v71 = vsub.s32 32, %v70
    %v72 = vshrl.u32 683565275, %v71
    %v73 = vshll.u32 683565275, %v70
    %v74 = vshrl.u32 2475754826, %v71
    %v75 = vor.u32 %v73, %v74
    %v76 = vshll.u32 2475754826, %v70
    %v77 = vshrl.u32 2131351028, %v71
    %v78 = vor.u32 %v76, %v77
    %v79 = vshll.u32 2131351028, %v70
    %v80 = vshrl.u32 2102212464, %v71
    %v81 = vor.u32 %v79, %v80
    %v82 = vshll.u32 2102212464, %v70
    %v83 = vshrl.u32 920167782, %v71
    %v84 = vor.u32 %v82, %v83
    %v85 = vshll.u32 920167782, %v70
    %v86 = vshrl.u32 1326507024, %v71
    %v87 = vor.u32 %v85, %v86
    %vm88 = vcmp.lt.s32.totalorder %v69, 1
    %vm89 = vcmp.lt.s32.totalorder %v69, 2
    %vm90 = vcmp.lt.s32.totalorder %v69, 3
    %vm91 = vcmp.lt.s32.totalorder %v69, 4
    %v92 = vsel %vm88, %v72, %v75
    %v93 = vsel %vm91, %v81, 2102212464
    %v94 = vsel %vm90, %v78, %v93
    %v95 = vsel %vm89, %v92, %v94
    %v96 = vsel %vm88, %v75, %v78
    %v97 = vsel %vm91, %v84, 920167782
    %v98 = vsel %vm90, %v81, %v97
    %v99 = vsel %vm89, %v96, %v98
    %v100 = vsel %vm88, %v78, %v81
    %v101 = vsel %vm91, %v87, 1326507024
    %v102 = vsel %vm90, %v84, %v101
    %v103 = vsel %vm89, %v100, %v102
    %v104 = vshll.u32 %v64, 8
    %v105 = vmul.u32.u64.compose %v104, %v103
    %v106 = vextract.low.u32 %v105
    %v107 = vextract.high.u32 %v105
    %v108 = vmul.u32.u64.compose %v104, %v99
    %v109 = vextract.low.u32 %v108
    %v110 = vextract.high.u32 %v108
    %v111 = vmul.u32 %v104, %v95
    %v112 = vadd.s32 %v107, %v109
    %vm113 = vc.u32 %v107, %v109
    %v114 = vadd.s32 %v110, 1
    %v115 = vsel %vm113, %v114, %v110
    %v116 = vadd.s32 %v111, %v115
    %v117 = vadd.s32 %v116, 536870912
    %v118 = vshrl.u32 %v117, 30
    %v119 = vshll.u32 %v118, 30
    %v120 = vsub.s32 %v116, %v119
    %vm121 = vcmp.lt.s32.totalorder %v120, 0
    %v122 = vsub.s32 0, %v120
    %v123 = vsel %vm121, %v122, %v120
    %v124 = vclz %v123
    %v125 = vsub.s32 %v124, 2
    %vm126 = vcmp.gt.s32.totalorder 0, %v125
    %v127 = vsel %vm126, 0, %v125
    %v128 = vsub.s32 32, %v127
    %v129 = vshll.u32 %v120, %v127
    %v130 = vshrl.u32 %v112, %v128
    %v131 = vor.u32 %v129, %v130
    %v132 = vsub.s32 4294967266, %v127
    %v133 = vadd.s32 %v132, 127
    %v134 = vshll.u32 %v133, 23
    %v135 = vor.u32 4788187, %v134
    %v136 = vand.u32 2147483647, %v135
    %v138 = vcvt.s32.f32 %v131
    %v139 = vmul.f32 %v138, %v136
    %v140 = vxor.u32 %v139, 2147483648
    %v141 = vsel %vm58, %v140, %v139
    %v142 = vsub.s32 4, %v118
    %v143 = vsel %vm58, %v142, %v118
    %v144 = vsel %vm57, %v55, %v141
    %v145 = vsel %vm57, 0, %v143
    %v146 = vcosq.f32.pop %v144
    %v147 = vsinq.f32.pop %v144
    %vm148 = vweird.f32 %v55
    %v149 = vadd.s32 %v145, 3
    %v150 = vand.u32 %v149, 3
    %vm151 = vcmp.lt.s32.totalorder %v150, 2
    %vm152 = vcmp.eq.s32.totalorder %v150, 0
    %v153 = vxor.u32 %v147, 2147483648
    %v154 = vsel %vm152, %v146, %v153
    %vm155 = vcmp.eq.s32.totalorder %v150, 2
    %v156 = vxor.u32 %v146, 2147483648
    %v157 = vsel %vm155, %v156, %v147
    %v158 = vsel %vm151, %v154, %v157
    %v159 = vsel %vm148, nan, %v158
    %v160 = vld [vmem:[%s2] sm:$0xff]
    %v161 = vld [vmem:[%s3] sm:$0x1]
    %v163 = vlaneseq
    %v164 = vshrl.u32 %v163, 7
    %v165 = vsub.s32 0, %v164
    %v166 = vrot.slane %v161, %v165
    %vm168 = vcmask 64512
    %v170 = vsel %vm168, %v159, 0
    %172 = vmatprep.subr.mxu0 0.0
    %173 = vmatpush1.msra.mxu0 0.0
    %174 = vmatprep.subr.mxu0 0.0
    %175 = vmatpush1.msra.mxu0 0.0
    %176 = vmatprep.subr.mxu0 0.0
    %177 = vmatpush1.msra.mxu0 0.0
    %178 = vmatprep.subr.mxu0 0.0
    %179 = vmatpush1.msra.mxu0 0.0
    %180 = vmatprep.subr.mxu0 0.0
    %181 = vmatpush1.msra.mxu0 0.0
    %182 = vmatprep.subr.mxu0 0.0
    %183 = vmatpush1.msra.mxu0 0.0
    %184 = vmatprep.subr.mxu0 0.0
    %185 = vmatpush1.msra.mxu0 0.0
    %186 = vmatprep.subr.mxu0 0.0
    %187 = vmatpush1.msra.mxu0 0.0
    %188 = vmatprep.subr.mxu0 0.0
    %189 = vmatpush1.msra.mxu0 0.0
    %190 = vmatprep.subr.mxu0 0.0
    %191 = vmatpush1.msra.mxu0 0.0
    %192 = vmatprep.subr.mxu0 0.0
    %193 = vmatpush1.msra.mxu0 0.0
    %194 = vmatprep.subr.mxu0 0.0
    %195 = vmatpush1.msra.mxu0 0.0
    %196 = vmatprep.subr.mxu0 0.0
    %197 = vmatpush1.msra.mxu0 0.0
    %198 = vmatprep.subr.mxu0 0.0
    %199 = vmatpush1.msra.mxu0 0.0
    %200 = vmatprep.subr.mxu0 0.0
    %201 = vmatpush1.msra.mxu0 0.0
    %202 = vmatprep.subr.mxu0 0.0
    %203 = vmatpush1.msra.mxu0 %v160
    %204 = vmatprep.subr.mxu0 0.0
    %205 = vmatpush2.msra.mxu0 0.0
    %206 = vmatprep.subr.mxu0 0.0
    %207 = vmatpush2.msra.mxu0 0.0
    %208 = vmatprep.subr.mxu0 0.0
    %209 = vmatpush2.msra.mxu0 0.0
    %210 = vmatprep.subr.mxu0 0.0
    %211 = vmatpush2.msra.mxu0 0.0
    %212 = vmatprep.subr.mxu0 0.0
    %213 = vmatpush2.msra.mxu0 0.0
    %214 = vmatprep.subr.mxu0 0.0
    %215 = vmatpush2.msra.mxu0 0.0
    %216 = vmatprep.subr.mxu0 0.0
    %217 = vmatpush2.msra.mxu0 0.0
    %218 = vmatprep.subr.mxu0 0.0
    %219 = vmatpush2.msra.mxu0 0.0
    %220 = vmatprep.subr.mxu0 0.0
    %221 = vmatpush2.msra.mxu0 0.0
    %222 = vmatprep.subr.mxu0 0.0
    %223 = vmatpush2.msra.mxu0 0.0
    %224 = vmatprep.subr.mxu0 0.0
    %225 = vmatpush2.msra.mxu0 0.0
    %226 = vmatprep.subr.mxu0 0.0
    %227 = vmatpush2.msra.mxu0 0.0
    %228 = vmatprep.subr.mxu0 0.0
    %229 = vmatpush2.msra.mxu0 0.0
    %230 = vmatprep.subr.mxu0 0.0
    %231 = vmatpush2.msra.mxu0 0.0
    %232 = vmatprep.subr.mxu0 0.0
    %233 = vmatpush2.msra.mxu0 0.0
    %234 = vmatprep.subr.mxu0 0.0
    %235 = vmatpush2.msra.mxu0 0.0
    %236 = vmatprep.mubr.f32.mxu0 0.0
    %237 = vmatmul.mubr.f32.gmra.mxu0 %v170
    %v238 = vpop.f32.mrf.mxu0
    %v239 = vadd.f32 %v166, %v238
    %v240 = vpop.f32.mrf.mxu0
    %241 = vdwg.mxu0
    %v242 = vmul.f32 %v239, 0.5
    %v243 = vtanh.pop %v242
    %v244 = vadd.f32 %v243, 1.0
    %v245 = vmul.f32 %v242, %v244
    %v246 = vld [vmem:[#allocation2] sm:$0xff]
    %v247 = vld [vmem:[#allocation2 + $0x8] sm:$0xff]
    %v248 = vld [vmem:[#allocation2 + $0x10] sm:$0xff]
    %v249 = vld [vmem:[#allocation2 + $0x18] sm:$0xff]
    %v250 = vld [vmem:[%s5] sm:$0x1]
    %v252 = vlaneseq
    %v253 = vshrl.u32 %v252, 7
    %v254 = vsub.s32 0, %v253
    %v255 = vrot.slane %v250, %v254
    %vm257 = vcmask 261120
    %v259 = vsel %vm257, %v245, 0
    %261 = vmatprep.subr.mxu0 0.0
    %262 = vmatpush1.msra.mxu0 0.0
    %263 = vmatprep.subr.mxu0 0.0
    %264 = vmatpush1.msra.mxu0 0.0
    %265 = vmatprep.subr.mxu0 0.0
    %266 = vmatpush1.msra.mxu0 0.0
    %267 = vmatprep.subr.mxu0 0.0
    %268 = vmatpush1.msra.mxu0 0.0
    %269 = vmatprep.subr.mxu0 0.0
    %270 = vmatpush1.msra.mxu0 0.0
    %271 = vmatprep.subr.mxu0 0.0
    %272 = vmatpush1.msra.mxu0 0.0
    %273 = vmatprep.subr.mxu0 0.0
    %274 = vmatpush1.msra.mxu0 0.0
    %275 = vmatprep.subr.mxu0 0.0
    %276 = vmatpush1.msra.mxu0 0.0
    %277 = vmatprep.subr.mxu0 0.0
    %278 = vmatpush1.msra.mxu0 0.0
    %279 = vmatprep.subr.mxu0 0.0
    %280 = vmatpush1.msra.mxu0 0.0
    %281 = vmatprep.subr.mxu0 0.0
    %282 = vmatpush1.msra.mxu0 0.0
    %283 = vmatprep.subr.mxu0 0.0
    %284 = vmatpush1.msra.mxu0 0.0
    %285 = vmatprep.subr.mxu0 0.0
    %286 = vmatpush1.msra.mxu0 %v249
    %287 = vmatprep.subr.mxu0 0.0
    %288 = vmatpush1.msra.mxu0 %v248
    %289 = vmatprep.subr.mxu0 0.0
    %290 = vmatpush1.msra.mxu0 %v247
    %291 = vmatprep.subr.mxu0 0.0
    %292 = vmatpush1.msra.mxu0 %v246
    %293 = vmatprep.subr.mxu0 0.0
    %294 = vmatpush2.msra.mxu0 0.0
    %295 = vmatprep.subr.mxu0 0.0
    %296 = vmatpush2.msra.mxu0 0.0
    %297 = vmatprep.subr.mxu0 0.0
    %298 = vmatpush2.msra.mxu0 0.0
    %299 = vmatprep.subr.mxu0 0.0
    %300 = vmatpush2.msra.mxu0 0.0
    %301 = vmatprep.subr.mxu0 0.0
    %302 = vmatpush2.msra.mxu0 0.0
    %303 = vmatprep.subr.mxu0 0.0
    %304 = vmatpush2.msra.mxu0 0.0
    %305 = vmatprep.subr.mxu0 0.0
    %306 = vmatpush2.msra.mxu0 0.0
    %307 = vmatprep.subr.mxu0 0.0
    %308 = vmatpush2.msra.mxu0 0.0
    %309 = vmatprep.subr.mxu0 0.0
    %310 = vmatpush2.msra.mxu0 0.0
    %311 = vmatprep.subr.mxu0 0.0
    %312 = vmatpush2.msra.mxu0 0.0
    %313 = vmatprep.subr.mxu0 0.0
    %314 = vmatpush2.msra.mxu0 0.0
    %315 = vmatprep.subr.mxu0 0.0
    %316 = vmatpush2.msra.mxu0 0.0
    %317 = vmatprep.subr.mxu0 0.0
    %318 = vmatpush2.msra.mxu0 0.0
    %319 = vmatprep.subr.mxu0 0.0
    %320 = vmatpush2.msra.mxu0 0.0
    %321 = vmatprep.subr.mxu0 0.0
    %322 = vmatpush2.msra.mxu0 0.0
    %323 = vmatprep.subr.mxu0 0.0
    %324 = vmatpush2.msra.mxu0 0.0
    %325 = vmatprep.mubr.f32.mxu0 0.0
    %326 = vmatmul.mubr.f32.gmra.mxu0 %v259
    %v327 = vpop.f32.mrf.mxu0
    %v328 = vadd.f32 %v255, %v327
    %v329 = vpop.f32.mrf.mxu0
    %330 = vdwg.mxu0
    %331 = vst.msk [vmem:[#allocation5] sm:$0xff] %vm257, %v328
    // Predicated region
    $region30: #{tpu_custom_call.1} parent=1 // pred_check
      _
    $region31: #{tpu_custom_call.1} parent=1 // pred_check_branch
      %333 = sbr.rel (0) target = $region33
    $region32: #{tpu_custom_call.1} parent=1 // pred_region
      %s335 = ssub.s32 128, 128
      %336 = vsyncadd [#allocation4], %s335
      %s338 = sshll.u32 [#allocation5], 4
      %s339 = int_to_ptr.vmem [resolvable:$true] %s338
      %341 = dma.vmem_to_hbm [thread:$0]  %s339, 128, %s6, [#allocation4]
    $region33: #{tpu_custom_call.1} parent=1 // pred_fallthru
      _
    // Predicated region
    $region34: #{tpu_custom_call.1} parent=1 // pred_check
      _
    $region35: #{tpu_custom_call.1} parent=1 // pred_check_branch
      %343 = sbr.rel (0) target = $region37
    $region36: #{tpu_custom_call.1} parent=1 // pred_region
      %344 = dma.done [#allocation4], 128
    $region37: #{tpu_custom_call.1} parent=1 // pred_fallthru
      _
    %345 = vsyncpa [#allocation3], 1
    %346 = vsyncpa [#allocation4], 1

// kernel: tpu_custom_call.1
$region0: #{tpu_custom_call.1}
  #allocation0 [shape = 'u32[]', space=smem, size = 0x4, offset = 0x4, fixed_abs, tag = 'smem constant byte address 0x4 - core index']
  #allocation1 [shape = 'u32[144,128]{1,0:T(1,128)}', space=vmem, size = 0x12000, scoped, tag = 'internal scratch']
  %s0 = inlined_call_operand.vmem [shape: f32[8,1], index: 0, kind: input, shape index: {}]
  %s1 = inlined_call_operand.vmem [shape: f32[2,8], index: 1, kind: input, shape index: {}]
  %s2 = inlined_call_operand.vmem [shape: f32[8,32], index: 2, kind: input, shape index: {}]
  %s3 = inlined_call_operand.vmem [shape: f32[1,32], index: 3, kind: input, shape index: {}]
  %s4 = inlined_call_operand.hbm [shape: f32[32,32], index: 4, kind: input, shape index: {}]
  %s5 = inlined_call_operand.vmem [shape: f32[1,32], index: 5, kind: input, shape index: {}]
  %s6 = inlined_call_operand.hbm [shape: f32[8,32], index: 6, kind: output, shape index: {}]
  %s7 = sld [smem:[#allocation0]]
  $region38: #{tpu_custom_call.1} parent=0
    _
  %s9 = ssub.s32 1, %s7
  %s10 = scalar_select 0, %s9, %s7
  $region1: #{tpu_custom_call.1} parent=0
    #allocation2 [shape = 'u8[16384]{0}', space=vmem, size = 0x4000, scoped, tag = 'input window, operand 4, single buffered']
    #allocation3 [shape = 's32[1]{0}', space=sflag, size = 0x4, scoped, tag = 'scoped memory for tpu_custom_call.1']
    #allocation4 [shape = 's32[1]{0}', space=sflag, size = 0x4, scoped, tag = 'scoped memory for tpu_custom_call.1']
    #allocation5 [shape = 'u8[4096]{0}', space=vmem, size = 0x1000, scoped, tag = 'output window, operand 0, single buffered']
    %11 = vsyncpa [#allocation3], 0
    %12 = vsyncpa [#allocation4], 0
    // Predicated region
    $region2: #{tpu_custom_call.1} parent=1 // pred_check
      _
    $region3: #{tpu_custom_call.1} parent=1 // pred_check_branch
      %14 = sbr.rel (0) target = $region5
    $region4: #{tpu_custom_call.1} parent=1 // pred_region
      _
    $region5: #{tpu_custom_call.1} parent=1 // pred_fallthru
      _
    // Predicated region
    $region6: #{tpu_custom_call.1} parent=1 // pred_check
      _
    $region7: #{tpu_custom_call.1} parent=1 // pred_check_branch
      %16 = sbr.rel (0) target = $region9
    $region8: #{tpu_custom_call.1} parent=1 // pred_region
      _
    $region9: #{tpu_custom_call.1} parent=1 // pred_fallthru
      _
    // Predicated region
    $region10: #{tpu_custom_call.1} parent=1 // pred_check
      _
    $region11: #{tpu_custom_call.1} parent=1 // pred_check_branch
      %18 = sbr.rel (0) target = $region13
    $region12: #{tpu_custom_call.1} parent=1 // pred_region
      _
    $region13: #{tpu_custom_call.1} parent=1 // pred_fallthru
      _
    // Predicated region
    $region14: #{tpu_custom_call.1} parent=1 // pred_check
      _
    $region15: #{tpu_custom_call.1} parent=1 // pred_check_branch
      %20 = sbr.rel (0) target = $region17
    $region16: #{tpu_custom_call.1} parent=1 // pred_region
      _
    $region17: #{tpu_custom_call.1} parent=1 // pred_fallthru
      _
    // Predicated region
    $region18: #{tpu_custom_call.1} parent=1 // pred_check
      _
    $region19: #{tpu_custom_call.1} parent=1 // pred_check_branch
      %22 = sbr.rel (0) target = $region21
    $region20: #{tpu_custom_call.1} parent=1 // pred_region
      %s24 = ssub.s32 512, 512
      %25 = vsyncadd [#allocation3], %s24
      %s26 = sshll.u32 [#allocation2], 4
      %s27 = int_to_ptr.vmem [resolvable:$true] %s26
      %32 = dma.hbm_to_vmem [thread:$0]  %s4, 512, %s27, [#allocation3], 128, 128, 8
    $region21: #{tpu_custom_call.1} parent=1 // pred_fallthru
      _
    // Predicated region
    $region22: #{tpu_custom_call.1} parent=1 // pred_check
      _
    $region23: #{tpu_custom_call.1} parent=1 // pred_check_branch
      %34 = sbr.rel (0) target = $region25
    $region24: #{tpu_custom_call.1} parent=1 // pred_region
      _
    $region25: #{tpu_custom_call.1} parent=1 // pred_fallthru
      _
    // Predicated region
    $region26: #{tpu_custom_call.1} parent=1 // pred_check
      _
    $region27: #{tpu_custom_call.1} parent=1 // pred_check_branch
      %36 = sbr.rel (0) target = $region29
    $region28: #{tpu_custom_call.1} parent=1 // pred_region
      %37 = dma.done [#allocation3], 512
    $region29: #{tpu_custom_call.1} parent=1 // pred_fallthru
      _
    %v38 = vld [vmem:[%s0] sm:$0xff]
    %v39 = vld [vmem:[%s1] sm:$0x1]
    %v40 = vld [vmem:[%s1 + $0x1] sm:$0x1]
    %42 = vset.pattern.permute.xlu0 0
    %43 = vperm.xlu0 %42, %v38
    %v44 = vpop.permute.xlu0 %43
    %v46 = vlaneseq
    %v47 = vshrl.u32 %v46, 7
    %v48 = vsub.s32 0, %v47
    %v49 = vrot.slane %v39, %v48
    %v50 = vmul.f32 %v44, %v49
    %v51 = vlaneseq
    %v52 = vshrl.u32 %v51, 7
    %v53 = vsub.s32 0, %v52
    %v54 = vrot.slane %v40, %v53
    %v55 = vadd.f32 %v50, %v54
    %v56 = vand.u32 2147483647, %v55
    %vm57 = vcmp.le.f32.partialorder %v56, 0.7853982
    %vm58 = vcmp.lt.s32.totalorder %v55, 0
    %v59 = vand.u32 %v55, 2139095040
    %v60 = vshrl.u32 %v59, 23
    %v61 = vsub.s32 %v60, 127
    %v62 = vand.u32 2147483647, %v55
    %v63 = vand.u32 %v62, 8388607
    %v64 = vor.u32 %v63, 8388608
    %v65 = vsub.s32 0, %v64
    %v66 = vadd.s32 %v61, 1
    %vm67 = vcmp.gt.s32.totalorder %v66, 0
    %v68 = vsel %vm67, %v66, 0
    %v69 = vshrl.u32 %v68, 5
    %v70 = vand.u32 %v68, 31
    %v71 = vsub.s32 32, %v70
    %v72 = vshrl.u32 683565275, %v71
    %v73 = vshll.u32 683565275, %v70
    %v74 = vshrl.u32 2475754826, %v71
    %v75 = vor.u32 %v73, %v74
    %v76 = vshll.u32 2475754826, %v70
    %v77 = vshrl.u32 2131351028, %v71
    %v78 = vor.u32 %v76, %v77
    %v79 = vshll.u32 2131351028, %v70
    %v80 = vshrl.u32 2102212464, %v71
    %v81 = vor.u32 %v79, %v80
    %v82 = vshll.u32 2102212464, %v70
    %v83 = vshrl.u32 920167782, %v71
    %v84 = vor.u32 %v82, %v83
    %v85 = vshll.u32 920167782, %v70
    %v86 = vshrl.u32 1326507024, %v71
    %v87 = vor.u32 %v85, %v86
    %vm88 = vcmp.lt.s32.totalorder %v69, 1
    %vm89 = vcmp.lt.s32.totalorder %v69, 2
    %vm90 = vcmp.lt.s32.totalorder %v69, 3
    %vm91 = vcmp.lt.s32.totalorder %v69, 4
    %v92 = vsel %vm88, %v72, %v75
    %v93 = vsel %vm91, %v81, 2102212464
    %v94 = vsel %vm90, %v78, %v93
    %v95 = vsel %vm89, %v92, %v94
    %v96 = vsel %vm88, %v75, %v78
    %v97 = vsel %vm91, %v84, 920167782
    %v98 = vsel %vm90, %v81, %v97
    %v99 = vsel %vm89, %v96, %v98
    %v100 = vsel %vm88, %v78, %v81
    %v101 = vsel %vm91, %v87, 1326507024
    %v102 = vsel %vm90, %v84, %v101
    %v103 = vsel %vm89, %v100, %v102
    %v104 = vshll.u32 %v64, 8
    %v105 = vmul.u32.u64.compose %v104, %v103
    %v106 = vextract.low.u32 %v105
    %v107 = vextract.high.u32 %v105
    %v108 = vmul.u32.u64.compose %v104, %v99
    %v109 = vextract.low.u32 %v108
    %v110 = vextract.high.u32 %v108
    %v111 = vmul.u32 %v104, %v95
    %v112 = vadd.s32 %v107, %v109
    %vm113 = vc.u32 %v107, %v109
    %v114 = vadd.s32 %v110, 1
    %v115 = vsel %vm113, %v114, %v110
    %v116 = vadd.s32 %v111, %v115
    %v117 = vadd.s32 %v116, 536870912
    %v118 = vshrl.u32 %v117, 30
    %v119 = vshll.u32 %v118, 30
    %v120 = vsub.s32 %v116, %v119
    %vm121 = vcmp.lt.s32.totalorder %v120, 0
    %v122 = vsub.s32 0, %v120
    %v123 = vsel %vm121, %v122, %v120
    %v124 = vclz %v123
    %v125 = vsub.s32 %v124, 2
    %vm126 = vcmp.gt.s32.totalorder 0, %v125
    %v127 = vsel %vm126, 0, %v125
    %v128 = vsub.s32 32, %v127
    %v129 = vshll.u32 %v120, %v127
    %v130 = vshrl.u32 %v112, %v128
    %v131 = vor.u32 %v129, %v130
    %v132 = vsub.s32 4294967266, %v127
    %v133 = vadd.s32 %v132, 127
    %v134 = vshll.u32 %v133, 23
    %v135 = vor.u32 4788187, %v134
    %v136 = vand.u32 2147483647, %v135
    %v138 = vcvt.s32.f32 %v131
    %v139 = vmul.f32 %v138, %v136
    %v140 = vxor.u32 %v139, 2147483648
    %v141 = vsel %vm58, %v140, %v139
    %v142 = vsub.s32 4, %v118
    %v143 = vsel %vm58, %v142, %v118
    %v144 = vsel %vm57, %v55, %v141
    %v145 = vsel %vm57, 0, %v143
    %v146 = vcosq.f32.pop %v144
    %v147 = vsinq.f32.pop %v144
    %vm148 = vweird.f32 %v55
    %v149 = vadd.s32 %v145, 3
    %v150 = vand.u32 %v149, 3
    %vm151 = vcmp.lt.s32.totalorder %v150, 2
    %vm152 = vcmp.eq.s32.totalorder %v150, 0
    %v153 = vxor.u32 %v147, 2147483648
    %v154 = vsel %vm152, %v146, %v153
    %vm155 = vcmp.eq.s32.totalorder %v150, 2
    %v156 = vxor.u32 %v146, 2147483648
    %v157 = vsel %vm155, %v156, %v147
    %v158 = vsel %vm151, %v154, %v157
    %v159 = vsel %vm148, nan, %v158
    %v160 = vld [vmem:[%s2] sm:$0xff]
    %v161 = vld [vmem:[%s3] sm:$0x1]
    %v163 = vlaneseq
    %v164 = vshrl.u32 %v163, 7
    %v165 = vsub.s32 0, %v164
    %v166 = vrot.slane %v161, %v165
    %vm168 = vcmask 64512
    %v170 = vsel %vm168, %v159, 0
    %172 = vmatprep.subr.mxu0 0.0
    %173 = vmatpush1.msra.mxu0 0.0
    %174 = vmatprep.subr.mxu0 0.0
    %175 = vmatpush1.msra.mxu0 0.0
    %176 = vmatprep.subr.mxu0 0.0
    %177 = vmatpush1.msra.mxu0 0.0
    %178 = vmatprep.subr.mxu0 0.0
    %179 = vmatpush1.msra.mxu0 0.0
    %180 = vmatprep.subr.mxu0 0.0
    %181 = vmatpush1.msra.mxu0 0.0
    %182 = vmatprep.subr.mxu0 0.0
    %183 = vmatpush1.msra.mxu0 0.0
    %184 = vmatprep.subr.mxu0 0.0
    %185 = vmatpush1.msra.mxu0 0.0
    %186 = vmatprep.subr.mxu0 0.0
    %187 = vmatpush1.msra.mxu0 0.0
    %188 = vmatprep.subr.mxu0 0.0
    %189 = vmatpush1.msra.mxu0 0.0
    %190 = vmatprep.subr.mxu0 0.0
    %191 = vmatpush1.msra.mxu0 0.0
    %192 = vmatprep.subr.mxu0 0.0
    %193 = vmatpush1.msra.mxu0 0.0
    %194 = vmatprep.subr.mxu0 0.0
    %195 = vmatpush1.msra.mxu0 0.0
    %196 = vmatprep.subr.mxu0 0.0
    %197 = vmatpush1.msra.mxu0 0.0
    %198 = vmatprep.subr.mxu0 0.0
    %199 = vmatpush1.msra.mxu0 0.0
    %200 = vmatprep.subr.mxu0 0.0
    %201 = vmatpush1.msra.mxu0 0.0
    %202 = vmatprep.subr.mxu0 0.0
    %203 = vmatpush1.msra.mxu0 %v160
    %204 = vmatprep.subr.mxu0 0.0
    %205 = vmatpush2.msra.mxu0 0.0
    %206 = vmatprep.subr.mxu0 0.0
    %207 = vmatpush2.msra.mxu0 0.0
    %208 = vmatprep.subr.mxu0 0.0
    %209 = vmatpush2.msra.mxu0 0.0
    %210 = vmatprep.subr.mxu0 0.0
    %211 = vmatpush2.msra.mxu0 0.0
    %212 = vmatprep.subr.mxu0 0.0
    %213 = vmatpush2.msra.mxu0 0.0
    %214 = vmatprep.subr.mxu0 0.0
    %215 = vmatpush2.msra.mxu0 0.0
    %216 = vmatprep.subr.mxu0 0.0
    %217 = vmatpush2.msra.mxu0 0.0
    %218 = vmatprep.subr.mxu0 0.0
    %219 = vmatpush2.msra.mxu0 0.0
    %220 = vmatprep.subr.mxu0 0.0
    %221 = vmatpush2.msra.mxu0 0.0
    %222 = vmatprep.subr.mxu0 0.0
    %223 = vmatpush2.msra.mxu0 0.0
    %224 = vmatprep.subr.mxu0 0.0
    %225 = vmatpush2.msra.mxu0 0.0
    %226 = vmatprep.subr.mxu0 0.0
    %227 = vmatpush2.msra.mxu0 0.0
    %228 = vmatprep.subr.mxu0 0.0
    %229 = vmatpush2.msra.mxu0 0.0
    %230 = vmatprep.subr.mxu0 0.0
    %231 = vmatpush2.msra.mxu0 0.0
    %232 = vmatprep.subr.mxu0 0.0
    %233 = vmatpush2.msra.mxu0 0.0
    %234 = vmatprep.subr.mxu0 0.0
    %235 = vmatpush2.msra.mxu0 0.0
    %236 = vmatprep.mubr.f32.mxu0 0.0
    %237 = vmatmul.mubr.f32.gmra.mxu0 %v170
    %v238 = vpop.f32.mrf.mxu0
    %v239 = vadd.f32 %v166, %v238
    %v240 = vpop.f32.mrf.mxu0
    %241 = vdwg.mxu0
    %v242 = vmul.f32 %v239, 0.5
    %v243 = vtanh.pop %v242
    %v244 = vadd.f32 %v243, 1.0
    %v245 = vmul.f32 %v242, %v244
    %v246 = vld [vmem:[#allocation2] sm:$0xff]
    %v247 = vld [vmem:[#allocation2 + $0x8] sm:$0xff]
    %v248 = vld [vmem:[#allocation2 + $0x10] sm:$0xff]
    %v249 = vld [vmem:[#allocation2 + $0x18] sm:$0xff]
    %v250 = vld [vmem:[%s5] sm:$0x1]
    %v252 = vlaneseq
    %v253 = vshrl.u32 %v252, 7
    %v254 = vsub.s32 0, %v253
    %v255 = vrot.slane %v250, %v254
    %vm257 = vcmask 261120
    %v259 = vsel %vm257, %v245, 0
    %261 = vmatprep.subr.mxu0 0.0
    %262 = vmatpush1.msra.mxu0 0.0
    %263 = vmatprep.subr.mxu0 0.0
    %264 = vmatpush1.msra.mxu0 0.0
    %265 = vmatprep.subr.mxu0 0.0
    %266 = vmatpush1.msra.mxu0 0.0
    %267 = vmatprep.subr.mxu0 0.0
    %268 = vmatpush1.msra.mxu0 0.0
    %269 = vmatprep.subr.mxu0 0.0
    %270 = vmatpush1.msra.mxu0 0.0
    %271 = vmatprep.subr.mxu0 0.0
    %272 = vmatpush1.msra.mxu0 0.0
    %273 = vmatprep.subr.mxu0 0.0
    %274 = vmatpush1.msra.mxu0 0.0
    %275 = vmatprep.subr.mxu0 0.0
    %276 = vmatpush1.msra.mxu0 0.0
    %277 = vmatprep.subr.mxu0 0.0
    %278 = vmatpush1.msra.mxu0 0.0
    %279 = vmatprep.subr.mxu0 0.0
    %280 = vmatpush1.msra.mxu0 0.0
    %281 = vmatprep.subr.mxu0 0.0
    %282 = vmatpush1.msra.mxu0 0.0
    %283 = vmatprep.subr.mxu0 0.0
    %284 = vmatpush1.msra.mxu0 0.0
    %285 = vmatprep.subr.mxu0 0.0
    %286 = vmatpush1.msra.mxu0 %v249
    %287 = vmatprep.subr.mxu0 0.0
    %288 = vmatpush1.msra.mxu0 %v248
    %289 = vmatprep.subr.mxu0 0.0
    %290 = vmatpush1.msra.mxu0 %v247
    %291 = vmatprep.subr.mxu0 0.0
    %292 = vmatpush1.msra.mxu0 %v246
    %293 = vmatprep.subr.mxu0 0.0
    %294 = vmatpush2.msra.mxu0 0.0
    %295 = vmatprep.subr.mxu0 0.0
    %296 = vmatpush2.msra.mxu0 0.0
    %297 = vmatprep.subr.mxu0 0.0
    %298 = vmatpush2.msra.mxu0 0.0
    %299 = vmatprep.subr.mxu0 0.0
    %300 = vmatpush2.msra.mxu0 0.0
    %301 = vmatprep.subr.mxu0 0.0
    %302 = vmatpush2.msra.mxu0 0.0
    %303 = vmatprep.subr.mxu0 0.0
    %304 = vmatpush2.msra.mxu0 0.0
    %305 = vmatprep.subr.mxu0 0.0
    %306 = vmatpush2.msra.mxu0 0.0
    %307 = vmatprep.subr.mxu0 0.0
    %308 = vmatpush2.msra.mxu0 0.0
    %309 = vmatprep.subr.mxu0 0.0
    %310 = vmatpush2.msra.mxu0 0.0
    %311 = vmatprep.subr.mxu0 0.0
    %312 = vmatpush2.msra.mxu0 0.0
    %313 = vmatprep.subr.mxu0 0.0
    %314 = vmatpush2.msra.mxu0 0.0
    %315 = vmatprep.subr.mxu0 0.0
    %316 = vmatpush2.msra.mxu0 0.0
    %317 = vmatprep.subr.mxu0 0.0
    %318 = vmatpush2.msra.mxu0 0.0
    %319 = vmatprep.subr.mxu0 0.0
    %320 = vmatpush2.msra.mxu0 0.0
    %321 = vmatprep.subr.mxu0 0.0
    %322 = vmatpush2.msra.mxu0 0.0
    %323 = vmatprep.subr.mxu0 0.0
    %324 = vmatpush2.msra.mxu0 0.0
    %325 = vmatprep.mubr.f32.mxu0 0.0
    %326 = vmatmul.mubr.f32.gmra.mxu0 %v259
    %v327 = vpop.f32.mrf.mxu0
    %v328 = vadd.f32 %v255, %v327
    %v329 = vpop.f32.mrf.mxu0
    %330 = vdwg.mxu0
    %331 = vst.msk [vmem:[#allocation5] sm:$0xff] %vm257, %v328
    // Predicated region
    $region30: #{tpu_custom_call.1} parent=1 // pred_check
      _
    $region31: #{tpu_custom_call.1} parent=1 // pred_check_branch
      %333 = sbr.rel (0) target = $region33
    $region32: #{tpu_custom_call.1} parent=1 // pred_region
      %s335 = ssub.s32 128, 128
      %336 = vsyncadd [#allocation4], %s335
      %s338 = sshll.u32 [#allocation5], 4
      %s339 = int_to_ptr.vmem [resolvable:$true] %s338
      %341 = dma.vmem_to_hbm [thread:$0]  %s339, 128, %s6, [#allocation4]
    $region33: #{tpu_custom_call.1} parent=1 // pred_fallthru
      _
    // Predicated region
    $region34: #{tpu_custom_call.1} parent=1 // pred_check
      _
    $region35: #{tpu_custom_call.1} parent=1 // pred_check_branch
      %343 = sbr.rel (0) target = $region37
    $region36: #{tpu_custom_call.1} parent=1 // pred_region
      %344 = dma.done [#allocation4], 128
    $region37: #{tpu_custom_call.1} parent=1 // pred_fallthru
      _
    %345 = vsyncpa [#allocation3], 1
    %346 = vsyncpa [#allocation4], 1

</llo_original>
